<compile_context>
chip_gen: v7x
topology: tpu7x:2x2x1
jax: 0.10.0
libtpu: 0.0.40
codegen_flags: <defaults>
</compile_context>

<pallas_src>
import jax
import jax.numpy as jnp
from jax.experimental import pallas as pl
from jax.experimental.pallas import tpu as pltpu


def _cdiv(a, b):
    return -(-a // b)


def _round_up(x, m):
    return _cdiv(x, m) * m


def _vmem_capacity_bytes():
    # Per-generation VMEM capacity (v5e/v6e: 128 MiB, v7x: 64 MiB per core).
    try:
        info = pltpu.get_tpu_info()
        cap = int(getattr(info, "vmem_capacity_bytes", 0))
        if cap > 0:
            return cap
    except Exception:
        pass
    return 64 * 1024 * 1024  # conservative fallback (v7x-sized)


def _patch_proj_kernel(x_ref, w_ref, b_ref, o_ref):
    # x_ref: (tm, K) compute-dtype patch rows; w_ref: (K, Ep); b_ref: (1, Ep) f32;
    # o_ref: (tm, Ep).  One full-K, full-E MXU call per grid step; fp32
    # accumulation, bias add in fp32, single cast on store (minimal epilogue —
    # the store path is the bottleneck for production shapes).
    acc = jnp.dot(x_ref[...], w_ref[...], preferred_element_type=jnp.float32)
    o_ref[...] = (acc + b_ref[...]).astype(o_ref.dtype)


def patch_embed_forward(x, weight, bias, patch_size, *,
                        tile_m=1024,
                        compute_dtype=jnp.bfloat16,
                        out_dtype=None):
    """PatchEmbed.forward (Conv2d with stride == kernel == patch_size, flattened).

    x:      (B, C, T, H, W)   weight: (E, C, P, P)   bias: (E,)
    returns (B, T * H//P * W//P, E) in `out_dtype` (defaults to x.dtype).

    Precision note: matmul operands are cast to `compute_dtype` (bf16) for the
    MXU with fp32 accumulation.  Pass out_dtype=jnp.bfloat16 when the consumer
    runs in bf16 — the kernel is HBM-write bound and a bf16 output roughly
    halves wall clock on all generations.
    """
    B, C, T, H, W = x.shape
    P = patch_size
    E = weight.shape[0]
    assert H % P == 0, f"Input height ({H}) should be divisible by patch size ({P})."
    assert W % P == 0, f"Input width ({W}) should be divisible by patch size ({P})."
    # TODO(synk): dynamic_img_pad / circular pad_to_patch_size are no-ops when
    # H, W divide the patch size; only that (default) path is implemented.
    Hp, Wp = H // P, W // P
    K = C * P * P
    n_tok = T * Hp * Wp
    M = B * n_tok
    out_dtype = x.dtype if out_dtype is None else jnp.dtype(out_dtype)

    # --- glue (intended to fuse into the custom call via allow_input_fusion):
    # extract non-overlapping PxP patches with K ordered (c, ph, pw) to match
    # the flattened Conv2d weight (E, C, P, P).
    xp = x.reshape(B, C, T, Hp, P, Wp, P)
    xp = jnp.transpose(xp, (0, 2, 3, 5, 1, 4, 6))          # (B,T,Hp,Wp,C,P,P)
    patches = xp.reshape(M, K).astype(compute_dtype)       # (M, K), no padding

    # Lane-dense output: pad E to a multiple of 128 (no-op for Mochi's E=3072).
    E_pad = _round_up(E, 128)
    w_flat = weight.reshape(E, K).T.astype(compute_dtype)  # (K, E)
    b_row = bias.reshape(1, E).astype(jnp.float32)         # (1, E) fp32
    if E_pad != E:
        w_flat = jnp.pad(w_flat, ((0, 0), (0, E_pad - E)))
        b_row = jnp.pad(b_row, ((0, 0), (0, E_pad - E)))

    # --- M tiling from a per-generation VMEM budget.
    compute_sz = jnp.dtype(compute_dtype).itemsize
    out_sz = jnp.dtype(out_dtype).itemsize
    vmem_budget = min(int(_vmem_capacity_bytes() * 3 // 4), 96 * 1024 * 1024)
    resident = K * E_pad * compute_sz + E_pad * 4           # 1x weight + bias
    per_row = 2 * (K * compute_sz + E_pad * out_sz)         # 2x-buffered in/out rows
    tm_cap = max((vmem_budget - resident) // per_row, 16)
    tm = max((min(int(tile_m), int(tm_cap)) // 16) * 16, 16)
    tm = min(tm, _round_up(M, 16))
    grid_m = _cdiv(M, tm)
    if grid_m > 1 and grid_m % 2 == 1:
        # Even number of M-steps so v7x's two TensorCores split the parallel
        # axis evenly (also keeps the writeback pipeline fuller per core).
        tm_alt = _round_up(_cdiv(M, grid_m + 1), 16)
        if tm_alt >= 16 and _cdiv(M, tm_alt) % 2 == 0:
            tm = tm_alt
            grid_m = _cdiv(M, tm)

    # Scoped-VMEM limit: actual working set + modest headroom.  Don't
    # over-reserve (squeezes surrounding XLA fusions, especially on v7x).
    vmem_need = resident + tm * per_row
    vmem_limit = int(min(max(vmem_need + (4 << 20), 16 << 20), vmem_budget))

    x_sz = jnp.dtype(x.dtype).itemsize
    cost = pl.CostEstimate(
        flops=2 * M * K * E_pad,
        transcendentals=0,
        bytes_accessed=(M * K * x_sz                        # fused producer reads x once
                        + K * E_pad * compute_sz + E_pad * 4
                        + M * E_pad * out_sz),
    )

    out = pl.pallas_call(
        _patch_proj_kernel,
        out_shape=jax.ShapeDtypeStruct((M, E_pad), out_dtype),
        grid_spec=pltpu.PrefetchScalarGridSpec(
            num_scalar_prefetch=0,
            grid=(grid_m,),
            in_specs=[
                # Token tile; ragged tail block handled by Pallas (safe: rows
                # are independent, out-of-range output rows are never used).
                pl.BlockSpec((tm, K), lambda i: (i, 0)),
                # Resident weight / bias: constant index map, single-buffered.
                pl.BlockSpec((K, E_pad), lambda i: (0, 0),
                             pipeline_mode=pl.Buffered(buffer_count=1)),
                pl.BlockSpec((1, E_pad), lambda i: (0, 0),
                             pipeline_mode=pl.Buffered(buffer_count=1)),
            ],
            out_specs=pl.BlockSpec((tm, E_pad), lambda i: (i, 0)),
        ),
        compiler_params=pltpu.CompilerParams(
            dimension_semantics=("parallel",),
            vmem_limit_bytes=vmem_limit,
            allow_input_fusion=[True, False, False],
        ),
        cost_estimate=cost,
    )(patches, w_flat, b_row)

    if E_pad != E:
        out = out[:, :E]
    return out.reshape(B, n_tok, E)


if __name__ == "__main__":
    # Small, divisible shapes consistent with the module's forward.
    B, C, T, H, W = 2, 4, 2, 16, 16
    patch_size = 8
    embed_dim = 32

    key = jax.random.PRNGKey(0)
    kx, kw, kb = jax.random.split(key, 3)
    x = jax.random.normal(kx, (B, C, T, H, W), dtype=jnp.float32)
    # Deterministic synthetic Conv2d parameters (shapes from nn.Conv2d(C, E, P, P)).
    weight = jax.random.normal(kw, (embed_dim, C, patch_size, patch_size),
                               dtype=jnp.float32) * 0.02
    bias = jax.random.normal(kb, (embed_dim,), dtype=jnp.float32) * 0.02

    # Module-fidelity run (out dtype == x.dtype) and the fast bf16-out path.
    out = jax.block_until_ready(patch_embed_forward(x, weight, bias, patch_size))
    out_bf16 = jax.block_until_ready(
        patch_embed_forward(x, weight, bias, patch_size, out_dtype=jnp.bfloat16))

    # Pure-JAX fp32 reference (strided conv == patch matmul).
    ref = jax.lax.conv_general_dilated(
        x.transpose(0, 2, 1, 3, 4).reshape(B * T, C, H, W),   # (B*T, C, H, W)
        weight,
        window_strides=(patch_size, patch_size),
        padding="VALID",
        dimension_numbers=("NCHW", "OIHW", "NCHW"),
    ) + bias.reshape(1, embed_dim, 1, 1)
    Hp, Wp = H // patch_size, W // patch_size
    ref = ref.reshape(B, T, embed_dim, Hp, Wp).transpose(0, 1, 3, 4, 2)
    ref = ref.reshape(B, T * Hp * Wp, embed_dim)

    assert out.shape == (B, T * Hp * Wp, embed_dim), out.shape
    assert out.dtype == x.dtype, out.dtype
    assert out_bf16.dtype == jnp.bfloat16, out_bf16.dtype
    # Tolerance relaxed for bf16 matmul inputs (fp32 accumulation kept).
    assert jnp.allclose(out, ref, atol=2e-2, rtol=2e-2), float(jnp.abs(out - ref).max())
    assert jnp.allclose(out_bf16.astype(jnp.float32), ref, atol=5e-2, rtol=5e-2), \
        float(jnp.abs(out_bf16.astype(jnp.float32) - ref).max())
    print("KERNEL_OK")
</pallas_src>

<mosaic_0001>
module attributes {stable_mosaic.version = 11 : i64} {
  func.func @_patch_proj_kernel(%arg0: i32, %arg1: memref<16x256xbf16, #tpu.memory_space<vmem>>, %arg2: memref<256x128xbf16, #tpu.memory_space<vmem>>, %arg3: memref<1x128xf32, #tpu.memory_space<vmem>>, %arg4: memref<16x128xf32, #tpu.memory_space<vmem>>) attributes {dimension_semantics = [#tpu.dimension_semantics<parallel>], iteration_bounds = array<i64: 1>, scalar_prefetch = 0 : i64, scratch_operands = 0 : i64, tpu.core_type = #tpu.core_type<tc>, window_params = [{transform_indices = @transform_0, window_bounds = array<i64: 16, 256>}, {pipeline_mode = #tpu.pipeline_mode<synchronous>, transform_indices = @transform_1, window_bounds = array<i64: 256, 128>}, {pipeline_mode = #tpu.pipeline_mode<synchronous>, transform_indices = @transform_2, window_bounds = array<i64: 1, 128>}, {transform_indices = @transform_3, window_bounds = array<i64: 16, 128>}]} {
    %c0 = arith.constant 0 : index
    %c0_0 = arith.constant 0 : index
    %0 = vector.load %arg1[%c0, %c0_0] : memref<16x256xbf16, #tpu.memory_space<vmem>>, vector<16x256xbf16>
    %c0_1 = arith.constant 0 : index
    %c0_2 = arith.constant 0 : index
    %1 = vector.load %arg2[%c0_1, %c0_2] : memref<256x128xbf16, #tpu.memory_space<vmem>>, vector<256x128xbf16>
    %cst = arith.constant dense<0.000000e+00> : vector<16x128xf32>
    %2 = tpu.matmul %0, %1, %cst {dimension_numbers = #tpu.dot_dimension_numbers<[1], [0], [0], [1], [0, 0, 1, 1], [], []>} : vector<16x256xbf16>, vector<256x128xbf16>, vector<16x128xf32> -> vector<16x128xf32>
    %c0_3 = arith.constant 0 : index
    %c0_4 = arith.constant 0 : index
    %3 = vector.load %arg3[%c0_3, %c0_4] : memref<1x128xf32, #tpu.memory_space<vmem>>, vector<1x128xf32>
    %4 = vector.broadcast %3 : vector<1x128xf32> to vector<16x128xf32>
    %5 = arith.addf %2, %4 : vector<16x128xf32>
    %c0_5 = arith.constant 0 : index
    %c0_6 = arith.constant 0 : index
    %6 = vector.load %arg4[%c0_5, %c0_6] : memref<16x128xf32, #tpu.memory_space<vmem>>, vector<16x128xf32>
    tpu.vector_store %arg4[%c0_5, %c0_6], %5 {strides = array<i32>} : memref<16x128xf32, #tpu.memory_space<vmem>>, vector<16x128xf32>,
    return
  }
  func.func @transform_0(%arg0: i32) -> (i32, i32) {
    %c0_i32 = arith.constant 0 : i32
    %c0_i32_0 = arith.constant 0 : i32
    return %arg0, %c0_i32 : i32, i32
  }
  func.func @transform_1(%arg0: i32) -> (i32, i32) {
    %c0_i32 = arith.constant 0 : i32
    %c0_i32_0 = arith.constant 0 : i32
    %c0_i32_1 = arith.constant 0 : i32
    return %c0_i32, %c0_i32_0 : i32, i32
  }
  func.func @transform_2(%arg0: i32) -> (i32, i32) {
    %c0_i32 = arith.constant 0 : i32
    %c0_i32_0 = arith.constant 0 : i32
    %c0_i32_1 = arith.constant 0 : i32
    return %c0_i32, %c0_i32_0 : i32, i32
  }
  func.func @transform_3(%arg0: i32) -> (i32, i32) {
    %c0_i32 = arith.constant 0 : i32
    %c0_i32_0 = arith.constant 0 : i32
    return %arg0, %c0_i32 : i32, i32
  }
}

</mosaic_0001>

<llo_original>
// kernel: tpu_custom_call.1
$region0: #{tpu_custom_call.1}
  #allocation0 [shape = 'u32[]', space=smem, size = 0x4, offset = 0x4, fixed_abs, tag = 'smem constant byte address 0x4 - core index']
  #allocation1 [shape = 'u32[144,128]{1,0:T(1,128)}', space=vmem, size = 0x12000, scoped, tag = 'internal scratch']
  %s0 = inlined_call_operand.hbm [shape: bf16[16,256], index: 0, kind: input, shape index: {}]
  %s1 = inlined_call_operand.hbm [shape: bf16[256,128], index: 1, kind: input, shape index: {}]
  %s2 = inlined_call_operand.vmem [shape: f32[1,128], index: 2, kind: input, shape index: {}]
  %s3 = inlined_call_operand.hbm [shape: f32[16,128], index: 3, kind: output, shape index: {}]
  %s4 = sld [smem:[#allocation0]]
  $region30: #{tpu_custom_call.1} parent=0
    _
  %s6 = ssub.s32 1, %s4
  %s7 = scalar_select 0, %s6, %s4
  $region1: #{tpu_custom_call.1} parent=0
    #allocation2 [shape = 'u8[8192]{0}', space=vmem, size = 0x2000, scoped, tag = 'input window, operand 0, single buffered']
    #allocation3 [shape = 's32[1]{0}', space=sflag, size = 0x4, scoped, tag = 'scoped memory for tpu_custom_call.1']
    #allocation4 [shape = 's32[1]{0}', space=sflag, size = 0x4, scoped, tag = 'scoped memory for tpu_custom_call.1']
    #allocation5 [shape = 'u8[65536]{0}', space=vmem, size = 0x10000, scoped, tag = 'input window, operand 1, single buffered']
    #allocation6 [shape = 's32[1]{0}', space=sflag, size = 0x4, scoped, tag = 'scoped memory for tpu_custom_call.1']
    #allocation7 [shape = 'u8[8192]{0}', space=vmem, size = 0x2000, scoped, tag = 'output window, operand 0, single buffered']
    %8 = vsyncpa [#allocation3], 0
    %9 = vsyncpa [#allocation6], 0
    %10 = vsyncpa [#allocation4], 0
    // Predicated region
    $region2: #{tpu_custom_call.1} parent=1 // pred_check
      _
    $region3: #{tpu_custom_call.1} parent=1 // pred_check_branch
      %12 = sbr.rel (0) target = $region5
    $region4: #{tpu_custom_call.1} parent=1 // pred_region
      %s14 = ssub.s32 256, 256
      %15 = vsyncadd [#allocation3], %s14
      %s16 = sshll.u32 [#allocation2], 4
      %s17 = int_to_ptr.vmem [resolvable:$true] %s16
      %22 = dma.hbm_to_vmem [thread:$0]  %s0, 256, %s17, [#allocation3], 128, 128, 8
    $region5: #{tpu_custom_call.1} parent=1 // pred_fallthru
      _
    // Predicated region
    $region6: #{tpu_custom_call.1} parent=1 // pred_check
      _
    $region7: #{tpu_custom_call.1} parent=1 // pred_check_branch
      %24 = sbr.rel (0) target = $region9
    $region8: #{tpu_custom_call.1} parent=1 // pred_region
      %s26 = ssub.s32 2048, 2048
      %27 = vsyncadd [#allocation6], %s26
      %s28 = sshll.u32 [#allocation5], 4
      %s29 = int_to_ptr.vmem [resolvable:$true] %s28
      %34 = dma.hbm_to_vmem [thread:$0]  %s1, 2048, %s29, [#allocation6], 64, 64, 4
    $region9: #{tpu_custom_call.1} parent=1 // pred_fallthru
      _
    // Predicated region
    $region10: #{tpu_custom_call.1} parent=1 // pred_check
      _
    $region11: #{tpu_custom_call.1} parent=1 // pred_check_branch
      %36 = sbr.rel (0) target = $region13
    $region12: #{tpu_custom_call.1} parent=1 // pred_region
      _
    $region13: #{tpu_custom_call.1} parent=1 // pred_fallthru
      _
    // Predicated region
    $region14: #{tpu_custom_call.1} parent=1 // pred_check
      _
    $region15: #{tpu_custom_call.1} parent=1 // pred_check_branch
      %38 = sbr.rel (0) target = $region17
    $region16: #{tpu_custom_call.1} parent=1 // pred_region
      %39 = dma.done [#allocation3], 256
    $region17: #{tpu_custom_call.1} parent=1 // pred_fallthru
      _
    // Predicated region
    $region18: #{tpu_custom_call.1} parent=1 // pred_check
      _
    $region19: #{tpu_custom_call.1} parent=1 // pred_check_branch
      %41 = sbr.rel (0) target = $region21
    $region20: #{tpu_custom_call.1} parent=1 // pred_region
      %42 = dma.done [#allocation6], 2048
    $region21: #{tpu_custom_call.1} parent=1 // pred_fallthru
      _
    %v44 = vld [vmem:[#allocation2] sm:$0xff]
    %v45 = vld [vmem:[#allocation2 + $0x8] sm:$0xff]
    %v46 = vld [vmem:[#allocation5] sm:$0xf]
    %v47 = vld [vmem:[#allocation5 + $0x4] sm:$0xf]
    %v48 = vld [vmem:[#allocation5 + $0x8] sm:$0xf]
    %v49 = vld [vmem:[#allocation5 + $0xc] sm:$0xf]
    %v50 = vld [vmem:[#allocation5 + $0x10] sm:$0xf]
    %v51 = vld [vmem:[#allocation5 + $0x14] sm:$0xf]
    %v52 = vld [vmem:[#allocation5 + $0x18] sm:$0xf]
    %v53 = vld [vmem:[#allocation5 + $0x1c] sm:$0xf]
    %v54 = vld [vmem:[#allocation5 + $0x20] sm:$0xf]
    %v55 = vld [vmem:[#allocation5 + $0x24] sm:$0xf]
    %v56 = vld [vmem:[#allocation5 + $0x28] sm:$0xf]
    %v57 = vld [vmem:[#allocation5 + $0x2c] sm:$0xf]
    %v58 = vld [vmem:[#allocation5 + $0x30] sm:$0xf]
    %v59 = vld [vmem:[#allocation5 + $0x34] sm:$0xf]
    %v60 = vld [vmem:[#allocation5 + $0x38] sm:$0xf]
    %v61 = vld [vmem:[#allocation5 + $0x3c] sm:$0xf]
    %v62 = vld [vmem:[#allocation5 + $0x40] sm:$0xf]
    %v63 = vld [vmem:[#allocation5 + $0x44] sm:$0xf]
    %v64 = vld [vmem:[#allocation5 + $0x48] sm:$0xf]
    %v65 = vld [vmem:[#allocation5 + $0x4c] sm:$0xf]
    %v66 = vld [vmem:[#allocation5 + $0x50] sm:$0xf]
    %v67 = vld [vmem:[#allocation5 + $0x54] sm:$0xf]
    %v68 = vld [vmem:[#allocation5 + $0x58] sm:$0xf]
    %v69 = vld [vmem:[#allocation5 + $0x5c] sm:$0xf]
    %v70 = vld [vmem:[#allocation5 + $0x60] sm:$0xf]
    %v71 = vld [vmem:[#allocation5 + $0x64] sm:$0xf]
    %v72 = vld [vmem:[#allocation5 + $0x68] sm:$0xf]
    %v73 = vld [vmem:[#allocation5 + $0x6c] sm:$0xf]
    %v74 = vld [vmem:[#allocation5 + $0x70] sm:$0xf]
    %v75 = vld [vmem:[#allocation5 + $0x74] sm:$0xf]
    %v76 = vld [vmem:[#allocation5 + $0x78] sm:$0xf]
    %v77 = vld [vmem:[#allocation5 + $0x7c] sm:$0xf]
    %v78 = vld [vmem:[%s2] sm:$0x1]
    %v80 = vlaneseq
    %v81 = vshrl.u32 %v80, 7
    %v82 = vsub.s32 0, %v81
    %v83 = vrot.slane %v78, %v82
    %v87 = vunpack.c.l.b16 %v44
    %v88 = vunpack.c.h.b16 %v44
    %v89 = vunpack.c.l.b16 %v45
    %v90 = vunpack.c.h.b16 %v45
    %v91 = vpack.c.b16 %v89, %v87
    %v92 = vpack.c.b16 %v90, %v88
    %v127 = vunpack.c.l.b16 %v46
    %v128 = vunpack.c.l.b16 %v47
    %v129 = vunpack.c.l.b16 %v48
    %v130 = vunpack.c.l.b16 %v49
    %v131 = vunpack.c.l.b16 %v50
    %v132 = vunpack.c.l.b16 %v51
    %v133 = vunpack.c.l.b16 %v52
    %v134 = vunpack.c.l.b16 %v53
    %v135 = vunpack.c.l.b16 %v54
    %v136 = vunpack.c.l.b16 %v55
    %v137 = vunpack.c.l.b16 %v56
    %v138 = vunpack.c.l.b16 %v57
    %v139 = vunpack.c.l.b16 %v58
    %v140 = vunpack.c.l.b16 %v59
    %v141 = vunpack.c.l.b16 %v60
    %v142 = vunpack.c.l.b16 %v61
    %v143 = vunpack.c.l.b16 %v62
    %v144 = vunpack.c.l.b16 %v63
    %v145 = vunpack.c.l.b16 %v64
    %v146 = vunpack.c.l.b16 %v65
    %v147 = vunpack.c.l.b16 %v66
    %v148 = vunpack.c.l.b16 %v67
    %v149 = vunpack.c.l.b16 %v68
    %v150 = vunpack.c.l.b16 %v69
    %v151 = vunpack.c.l.b16 %v70
    %v152 = vunpack.c.l.b16 %v71
    %v153 = vunpack.c.l.b16 %v72
    %v154 = vunpack.c.l.b16 %v73
    %v155 = vunpack.c.l.b16 %v74
    %v156 = vunpack.c.l.b16 %v75
    %v157 = vunpack.c.l.b16 %v76
    %v158 = vunpack.c.l.b16 %v77
    %v159 = vpack.c.b16 %v128, %v127
    %v160 = vpack.c.b16 %v130, %v129
    %v161 = vpack.c.b16 %v132, %v131
    %v162 = vpack.c.b16 %v134, %v133
    %v163 = vpack.c.b16 %v136, %v135
    %v164 = vpack.c.b16 %v138, %v137
    %v165 = vpack.c.b16 %v140, %v139
    %v166 = vpack.c.b16 %v142, %v141
    %v167 = vpack.c.b16 %v144, %v143
    %v168 = vpack.c.b16 %v146, %v145
    %v169 = vpack.c.b16 %v148, %v147
    %v170 = vpack.c.b16 %v150, %v149
    %v171 = vpack.c.b16 %v152, %v151
    %v172 = vpack.c.b16 %v154, %v153
    %v173 = vpack.c.b16 %v156, %v155
    %v174 = vpack.c.b16 %v158, %v157
    %191 = vmatprep.subr.bf16.mxu0 0
    %192 = vmatpush1.bf16.msra.mxu0 %v159
    %193 = vmatprep.subr.bf16.mxu0 0
    %194 = vmatpush1.bf16.msra.mxu0 %v160
    %195 = vmatprep.subr.bf16.mxu0 0
    %196 = vmatpush1.bf16.msra.mxu0 %v161
    %197 = vmatprep.subr.bf16.mxu0 0
    %198 = vmatpush1.bf16.msra.mxu0 %v162
    %199 = vmatprep.subr.bf16.mxu0 0
    %200 = vmatpush1.bf16.msra.mxu0 %v163
    %201 = vmatprep.subr.bf16.mxu0 0
    %202 = vmatpush1.bf16.msra.mxu0 %v164
    %203 = vmatprep.subr.bf16.mxu0 0
    %204 = vmatpush1.bf16.msra.mxu0 %v165
    %205 = vmatprep.subr.bf16.mxu0 0
    %206 = vmatpush1.bf16.msra.mxu0 %v166
    %207 = vmatprep.subr.bf16.mxu0 0
    %208 = vmatpush1.bf16.msra.mxu0 %v167
    %209 = vmatprep.subr.bf16.mxu0 0
    %210 = vmatpush1.bf16.msra.mxu0 %v168
    %211 = vmatprep.subr.bf16.mxu0 0
    %212 = vmatpush1.bf16.msra.mxu0 %v169
    %213 = vmatprep.subr.bf16.mxu0 0
    %214 = vmatpush1.bf16.msra.mxu0 %v170
    %215 = vmatprep.subr.bf16.mxu0 0
    %216 = vmatpush1.bf16.msra.mxu0 %v171
    %217 = vmatprep.subr.bf16.mxu0 0
    %218 = vmatpush1.bf16.msra.mxu0 %v172
    %219 = vmatprep.subr.bf16.mxu0 0
    %220 = vmatpush1.bf16.msra.mxu0 %v173
    %221 = vmatprep.subr.bf16.mxu0 0
    %222 = vmatpush1.bf16.msra.mxu0 %v174
    %223 = vmatprep.mubr.bf16.mxu0 %v92
    %224 = vmatmul.mubr.bf16.gmra.mrb[0].mxu0 %v91
    %v225 = vpop.f32.mrb[0].mxu0
    %v226 = vadd.f32 %v83, %v225
    %v227 = vpop.f32.mrb[0].mxu0
    %v228 = vpop.f32.mrb[0].mxu0
    %v229 = vadd.f32 %v83, %v228
    %v230 = vpop.f32.mrb[0].mxu0
    %231 = vdwg.mxu0
    %232 = vst [vmem:[#allocation7] sm:$0xff] %v226
    %233 = vst [vmem:[#allocation7 + $0x8] sm:$0xff] %v229
    // Predicated region
    $region22: #{tpu_custom_call.1} parent=1 // pred_check
      _
    $region23: #{tpu_custom_call.1} parent=1 // pred_check_branch
      %235 = sbr.rel (0) target = $region25
    $region24: #{tpu_custom_call.1} parent=1 // pred_region
      %s237 = ssub.s32 256, 256
      %238 = vsyncadd [#allocation4], %s237
      %s239 = sshll.u32 [#allocation7], 4
      %s240 = int_to_ptr.vmem [resolvable:$true] %s239
      %245 = dma.vmem_to_hbm [thread:$0]  %s240, 256, %s3, [#allocation4], 128, 128, 8
    $region25: #{tpu_custom_call.1} parent=1 // pred_fallthru
      _
    // Predicated region
    $region26: #{tpu_custom_call.1} parent=1 // pred_check
      _
    $region27: #{tpu_custom_call.1} parent=1 // pred_check_branch
      %247 = sbr.rel (0) target = $region29
    $region28: #{tpu_custom_call.1} parent=1 // pred_region
      %248 = dma.done [#allocation4], 256
    $region29: #{tpu_custom_call.1} parent=1 // pred_fallthru
      _
    %249 = vsyncpa [#allocation3], 1
    %250 = vsyncpa [#allocation6], 1
    %251 = vsyncpa [#allocation4], 1

</llo_original>
